<compile_context>
chip_gen: v7x
topology: tpu7x:2x2x1
jax: 0.10.0
libtpu: 0.0.40
codegen_flags: <defaults>
</compile_context>

<pallas_src>
import jax
import jax.numpy as jnp
from jax.experimental import pallas as pl
from jax.experimental.pallas import tpu as pltpu


def _round_up(x, m):
    return ((x + m - 1) // m) * m


def _sampler_kernel(x_ref, w1_ref, b1_ref, wh_ref, bh_ref, eps_ref, out_ref):
    F = x_ref.shape[1]

    x = x_ref[...]                                   # (TB, F)  f32
    w1 = w1_ref[...]                                 # (F, H)
    wh = wh_ref[...]                                 # (H, 2F)

    # encode = tanh(mlp1(x)); MXU matmul with f32 accumulation.
    h = jnp.dot(x.astype(w1.dtype), w1, preferred_element_type=jnp.float32)
    encode = jnp.tanh(h + b1_ref[...])               # (TB, H) f32

    # Fused mu/logvar heads: y = encode @ [wmu | wvar] + [bmu | bvar].
    y = jnp.dot(encode.astype(wh.dtype), wh,
                preferred_element_type=jnp.float32) + bh_ref[...]   # (TB, 2F)
    mu = y[:, :F]
    logvar = y[:, F:]

    std = jnp.exp(0.5 * logvar)
    sample = eps_ref[...] * std + mu                 # reparameterized sample
    # KLD_element = 1 + logvar - mu^2 - exp(logvar); exp(logvar) == std*std.
    kld = 1.0 + logvar - mu * mu - std * std

    if F % 128 == 0:
        # Lane-aligned halves: two direct dense stores, no concat temporary.
        out_ref[:, :F] = sample.astype(out_ref.dtype)
        out_ref[:, F:] = kld.astype(out_ref.dtype)
    else:
        # Small / non-lane-aligned F (e.g. the demo): one dense block store.
        out_ref[...] = jnp.concatenate([sample, kld], axis=1).astype(out_ref.dtype)


def sampler_forward(x, w1, b1, wmu, bmu, wvar, bvar, eps,
                    *, block_b=512, matmul_dtype=jnp.float32,
                    out_dtype=jnp.float32):
    """Pallas TPU forward of Sampler.

    x:    (B, F) float32
    w1:   (F, H), b1: (1, H)
    wmu:  (H, F), bmu: (1, F)
    wvar: (H, F), bvar: (1, F)
    eps:  (B, F) standard-normal noise (passed in for determinism)
    returns (B, 2F) = concat([eps*std + mu, 1 + logvar - mu^2 - exp(logvar)], 1)
    """
    B, F = x.shape
    H = w1.shape[1]

    # Fuse the two heads into one (H, 2F) weight / (1, 2F) bias.
    w1c = w1.astype(matmul_dtype)
    w_heads = jnp.concatenate([wmu, wvar], axis=1).astype(matmul_dtype)
    b1c = b1.astype(jnp.float32).reshape(1, H)
    b_heads = jnp.concatenate([bmu, bvar], axis=1).astype(jnp.float32).reshape(1, 2 * F)

    # Batch tile: multiple of 8 sublanes, capped at block_b. No input padding;
    # the grid uses cdiv and Pallas masks the final partial tile.
    TB = min(block_b, _round_up(B, 8))
    # v7x has 2 TensorCores: ensure the "parallel" batch axis has >= 2 steps
    # whenever the batch is big enough to split (no effect on v5e/v6e).
    if pl.cdiv(B, TB) < 2 and B >= 16:
        TB = _round_up(pl.cdiv(B, 2), 8)
    nb = pl.cdiv(B, TB)

    # VMEM budget from actual buffer sizes (+ headroom), kept under v7x's
    # 64 MiB physical VMEM unless the buffers simply need more (in which case
    # the config only fits on v5e/v6e's 128 MiB anyway).
    w_itemsize = jnp.dtype(matmul_dtype).itemsize
    weight_bytes = ((w1c.size + w_heads.size) * w_itemsize
                    + (b1c.size + b_heads.size) * 4)
    stream_bytes = 2 * (TB * F * x.dtype.itemsize
                        + TB * F * eps.dtype.itemsize
                        + TB * 2 * F * jnp.dtype(out_dtype).itemsize)
    needed = 2 * weight_bytes + stream_bytes     # worst case: weights double-buffered
    vmem_limit = max(needed + 8 * 2**20, 32 * 2**20)
    vmem_limit = min(vmem_limit, max(56 * 2**20, needed + 4 * 2**20))

    cost = pl.CostEstimate(
        flops=2 * B * H * (F + 2 * F),           # mlp1 + fused heads
        transcendentals=B * (H + F),             # tanh + exp(0.5*logvar)
        bytes_accessed=(x.size + eps.size) * 4
        + weight_bytes
        + B * 2 * F * jnp.dtype(out_dtype).itemsize,
    )

    def build(single_buffer_weights):
        resident_kw = {}
        if single_buffer_weights:
            # Constant index_map -> weights stay VMEM-resident; single-buffer
            # them to halve their VMEM footprint (big H on v7x).
            resident_kw = dict(pipeline_mode=pl.Buffered(1))
        grid_spec = pltpu.PrefetchScalarGridSpec(
            num_scalar_prefetch=0,
            grid=(nb,),
            in_specs=[
                pl.BlockSpec((TB, F), lambda i: (i, 0)),                 # x tile
                pl.BlockSpec((F, H), lambda i: (0, 0), **resident_kw),   # w1
                pl.BlockSpec((1, H), lambda i: (0, 0), **resident_kw),   # b1
                pl.BlockSpec((H, 2 * F), lambda i: (0, 0), **resident_kw),  # fused W
                pl.BlockSpec((1, 2 * F), lambda i: (0, 0), **resident_kw),  # fused b
                pl.BlockSpec((TB, F), lambda i: (i, 0)),                 # eps tile
            ],
            out_specs=pl.BlockSpec((TB, 2 * F), lambda i: (i, 0)),
        )
        return pl.pallas_call(
            _sampler_kernel,
            out_shape=jax.ShapeDtypeStruct((B, 2 * F), out_dtype),
            grid_spec=grid_spec,
            compiler_params=pltpu.CompilerParams(
                dimension_semantics=("parallel",),
                vmem_limit_bytes=int(vmem_limit),
            ),
            cost_estimate=cost,
        )

    try:
        return build(True)(x, w1c, b1c, w_heads, b_heads, eps)
    except Exception:
        # pipeline_mode=pl.Buffered(1) not accepted by this Pallas version.
        return build(False)(x, w1c, b1c, w_heads, b_heads, eps)


def init_params(key, feature_size, hidden_size):
    """Deterministic init mimicking nn.Linear's uniform(-1/sqrt(in), 1/sqrt(in))."""
    ks = jax.random.split(key, 6)

    def lin(kw, kb, fan_in, fan_out):
        bound = 1.0 / (fan_in ** 0.5)
        w = jax.random.uniform(kw, (fan_in, fan_out), jnp.float32, -bound, bound)
        b = jax.random.uniform(kb, (1, fan_out), jnp.float32, -bound, bound)
        return w, b

    w1, b1 = lin(ks[0], ks[1], feature_size, hidden_size)
    wmu, bmu = lin(ks[2], ks[3], hidden_size, feature_size)
    wvar, bvar = lin(ks[4], ks[5], hidden_size, feature_size)
    return w1, b1, wmu, bmu, wvar, bvar


if __name__ == "__main__":
    feature_size = 32
    hidden_size = 64
    batch = 8

    key = jax.random.PRNGKey(0)
    k_x, k_eps, k_p = jax.random.split(key, 3)

    x = jax.random.normal(k_x, (batch, feature_size), jnp.float32)
    eps = jax.random.normal(k_eps, (batch, feature_size), jnp.float32)
    w1, b1, wmu, bmu, wvar, bvar = init_params(k_p, feature_size, hidden_size)

    out = sampler_forward(x, w1, b1, wmu, bmu, wvar, bvar, eps)
    out = jax.block_until_ready(out)

    # Reference in plain f32 JAX (same math as the PyTorch module).
    enc = jnp.tanh(x @ w1 + b1)
    mu = enc @ wmu + bmu
    logvar = enc @ wvar + bvar
    std = jnp.exp(0.5 * logvar)
    ref = jnp.concatenate(
        [eps * std + mu, 1.0 + logvar - mu ** 2 - jnp.exp(logvar)], axis=1)

    assert out.shape == (batch, 2 * feature_size)
    max_err = float(jnp.max(jnp.abs(out - ref)))
    assert jnp.allclose(out, ref, atol=2e-3, rtol=2e-3), max_err

    print("KERNEL_OK")
</pallas_src>

<mosaic_0001>
module attributes {stable_mosaic.version = 11 : i64} {
  func.func @_sampler_kernel(%arg0: i32, %arg1: memref<8x32xf32, #tpu.memory_space<vmem>>, %arg2: memref<32x64xf32, #tpu.memory_space<vmem>>, %arg3: memref<1x64xf32, #tpu.memory_space<vmem>>, %arg4: memref<64x64xf32, #tpu.memory_space<vmem>>, %arg5: memref<1x64xf32, #tpu.memory_space<vmem>>, %arg6: memref<8x32xf32, #tpu.memory_space<vmem>>, %arg7: memref<8x64xf32, #tpu.memory_space<vmem>>) attributes {dimension_semantics = [#tpu.dimension_semantics<parallel>], iteration_bounds = array<i64: 1>, scalar_prefetch = 0 : i64, scratch_operands = 0 : i64, tpu.core_type = #tpu.core_type<tc>, window_params = [{transform_indices = @transform_0, window_bounds = array<i64: 8, 32>}, {pipeline_mode = #tpu.pipeline_mode<synchronous>, transform_indices = @transform_1, window_bounds = array<i64: 32, 64>}, {pipeline_mode = #tpu.pipeline_mode<synchronous>, transform_indices = @transform_2, window_bounds = array<i64: 1, 64>}, {pipeline_mode = #tpu.pipeline_mode<synchronous>, transform_indices = @transform_3, window_bounds = array<i64: 64, 64>}, {pipeline_mode = #tpu.pipeline_mode<synchronous>, transform_indices = @transform_4, window_bounds = array<i64: 1, 64>}, {transform_indices = @transform_5, window_bounds = array<i64: 8, 32>}, {transform_indices = @transform_6, window_bounds = array<i64: 8, 64>}]} {
    %c0 = arith.constant 0 : index
    %c0_0 = arith.constant 0 : index
    %0 = vector.load %arg1[%c0, %c0_0] : memref<8x32xf32, #tpu.memory_space<vmem>>, vector<8x32xf32>
    %c0_1 = arith.constant 0 : index
    %c0_2 = arith.constant 0 : index
    %1 = vector.load %arg2[%c0_1, %c0_2] : memref<32x64xf32, #tpu.memory_space<vmem>>, vector<32x64xf32>
    %c0_3 = arith.constant 0 : index
    %c0_4 = arith.constant 0 : index
    %2 = vector.load %arg4[%c0_3, %c0_4] : memref<64x64xf32, #tpu.memory_space<vmem>>, vector<64x64xf32>
    %cst = arith.constant dense<0.000000e+00> : vector<8x64xf32>
    %3 = tpu.matmul %0, %1, %cst {dimension_numbers = #tpu.dot_dimension_numbers<[1], [0], [0], [1], [0, 0, 1, 1], [], []>} : vector<8x32xf32>, vector<32x64xf32>, vector<8x64xf32> -> vector<8x64xf32>
    %c0_5 = arith.constant 0 : index
    %c0_6 = arith.constant 0 : index
    %4 = vector.load %arg3[%c0_5, %c0_6] : memref<1x64xf32, #tpu.memory_space<vmem>>, vector<1x64xf32>
    %5 = vector.broadcast %4 : vector<1x64xf32> to vector<8x64xf32>
    %6 = arith.addf %3, %5 : vector<8x64xf32>
    %7 = math.tanh %6 : vector<8x64xf32>
    %cst_7 = arith.constant dense<0.000000e+00> : vector<8x64xf32>
    %8 = tpu.matmul %7, %2, %cst_7 {dimension_numbers = #tpu.dot_dimension_numbers<[1], [0], [0], [1], [0, 0, 1, 1], [], []>} : vector<8x64xf32>, vector<64x64xf32>, vector<8x64xf32> -> vector<8x64xf32>
    %c0_8 = arith.constant 0 : index
    %c0_9 = arith.constant 0 : index
    %9 = vector.load %arg5[%c0_8, %c0_9] : memref<1x64xf32, #tpu.memory_space<vmem>>, vector<1x64xf32>
    %10 = vector.broadcast %9 : vector<1x64xf32> to vector<8x64xf32>
    %11 = arith.addf %8, %10 : vector<8x64xf32>
    %12 = vector.extract_strided_slice %11 {offsets = [0, 0], sizes = [8, 32], strides = [1, 1]} : vector<8x64xf32> to vector<8x32xf32>
    %13 = vector.extract_strided_slice %11 {offsets = [0, 32], sizes = [8, 32], strides = [1, 1]} : vector<8x64xf32> to vector<8x32xf32>
    %cst_10 = arith.constant 5.000000e-01 : f32
    %14 = vector.broadcast %cst_10 : f32 to vector<8x32xf32>
    %15 = arith.mulf %14, %13 : vector<8x32xf32>
    %16 = math.exp %15 : vector<8x32xf32>
    %c0_11 = arith.constant 0 : index
    %c0_12 = arith.constant 0 : index
    %17 = vector.load %arg6[%c0_11, %c0_12] : memref<8x32xf32, #tpu.memory_space<vmem>>, vector<8x32xf32>
    %18 = arith.mulf %17, %16 : vector<8x32xf32>
    %19 = arith.addf %18, %12 : vector<8x32xf32>
    %cst_13 = arith.constant 1.000000e+00 : f32
    %20 = vector.broadcast %cst_13 : f32 to vector<8x32xf32>
    %21 = arith.addf %20, %13 : vector<8x32xf32>
    %22 = arith.mulf %12, %12 : vector<8x32xf32>
    %23 = arith.subf %21, %22 : vector<8x32xf32>
    %24 = arith.mulf %16, %16 : vector<8x32xf32>
    %25 = arith.subf %23, %24 : vector<8x32xf32>
    %26 = tpu.concatenate %19, %25 in 1 : vector<8x32xf32>, vector<8x32xf32> -> vector<8x64xf32>
    %c0_14 = arith.constant 0 : index
    %c0_15 = arith.constant 0 : index
    %27 = vector.load %arg7[%c0_14, %c0_15] : memref<8x64xf32, #tpu.memory_space<vmem>>, vector<8x64xf32>
    tpu.vector_store %arg7[%c0_14, %c0_15], %26 {strides = array<i32>} : memref<8x64xf32, #tpu.memory_space<vmem>>, vector<8x64xf32>,
    return
  }
  func.func @transform_0(%arg0: i32) -> (i32, i32) {
    %c0_i32 = arith.constant 0 : i32
    %c0_i32_0 = arith.constant 0 : i32
    return %arg0, %c0_i32 : i32, i32
  }
  func.func @transform_1(%arg0: i32) -> (i32, i32) {
    %c0_i32 = arith.constant 0 : i32
    %c0_i32_0 = arith.constant 0 : i32
    %c0_i32_1 = arith.constant 0 : i32
    return %c0_i32, %c0_i32_0 : i32, i32
  }
  func.func @transform_2(%arg0: i32) -> (i32, i32) {
    %c0_i32 = arith.constant 0 : i32
    %c0_i32_0 = arith.constant 0 : i32
    %c0_i32_1 = arith.constant 0 : i32
    return %c0_i32, %c0_i32_0 : i32, i32
  }
  func.func @transform_3(%arg0: i32) -> (i32, i32) {
    %c0_i32 = arith.constant 0 : i32
    %c0_i32_0 = arith.constant 0 : i32
    %c0_i32_1 = arith.constant 0 : i32
    return %c0_i32, %c0_i32_0 : i32, i32
  }
  func.func @transform_4(%arg0: i32) -> (i32, i32) {
    %c0_i32 = arith.constant 0 : i32
    %c0_i32_0 = arith.constant 0 : i32
    %c0_i32_1 = arith.constant 0 : i32
    return %c0_i32, %c0_i32_0 : i32, i32
  }
  func.func @transform_5(%arg0: i32) -> (i32, i32) {
    %c0_i32 = arith.constant 0 : i32
    %c0_i32_0 = arith.constant 0 : i32
    return %arg0, %c0_i32 : i32, i32
  }
  func.func @transform_6(%arg0: i32) -> (i32, i32) {
    %c0_i32 = arith.constant 0 : i32
    %c0_i32_0 = arith.constant 0 : i32
    return %arg0, %c0_i32 : i32, i32
  }
}

module attributes {stable_mosaic.version = 11 : i64} {
  func.func @_sampler_kernel(%arg0: i32, %arg1: memref<8x32xf32, #tpu.memory_space<vmem>>, %arg2: memref<32x64xf32, #tpu.memory_space<vmem>>, %arg3: memref<1x64xf32, #tpu.memory_space<vmem>>, %arg4: memref<64x64xf32, #tpu.memory_space<vmem>>, %arg5: memref<1x64xf32, #tpu.memory_space<vmem>>, %arg6: memref<8x32xf32, #tpu.memory_space<vmem>>, %arg7: memref<8x64xf32, #tpu.memory_space<vmem>>) attributes {dimension_semantics = [#tpu.dimension_semantics<parallel>], iteration_bounds = array<i64: 1>, scalar_prefetch = 0 : i64, scratch_operands = 0 : i64, tpu.core_type = #tpu.core_type<tc>, window_params = [{transform_indices = @transform_0, window_bounds = array<i64: 8, 32>}, {pipeline_mode = #tpu.pipeline_mode<synchronous>, transform_indices = @transform_1, window_bounds = array<i64: 32, 64>}, {pipeline_mode = #tpu.pipeline_mode<synchronous>, transform_indices = @transform_2, window_bounds = array<i64: 1, 64>}, {pipeline_mode = #tpu.pipeline_mode<synchronous>, transform_indices = @transform_3, window_bounds = array<i64: 64, 64>}, {pipeline_mode = #tpu.pipeline_mode<synchronous>, transform_indices = @transform_4, window_bounds = array<i64: 1, 64>}, {transform_indices = @transform_5, window_bounds = array<i64: 8, 32>}, {transform_indices = @transform_6, window_bounds = array<i64: 8, 64>}]} {
    %c0 = arith.constant 0 : index
    %c0_0 = arith.constant 0 : index
    %0 = vector.load %arg1[%c0, %c0_0] : memref<8x32xf32, #tpu.memory_space<vmem>>, vector<8x32xf32>
    %c0_1 = arith.constant 0 : index
    %c0_2 = arith.constant 0 : index
    %1 = vector.load %arg2[%c0_1, %c0_2] : memref<32x64xf32, #tpu.memory_space<vmem>>, vector<32x64xf32>
    %c0_3 = arith.constant 0 : index
    %c0_4 = arith.constant 0 : index
    %2 = vector.load %arg4[%c0_3, %c0_4] : memref<64x64xf32, #tpu.memory_space<vmem>>, vector<64x64xf32>
    %cst = arith.constant dense<0.000000e+00> : vector<8x64xf32>
    %3 = tpu.matmul %0, %1, %cst {dimension_numbers = #tpu.dot_dimension_numbers<[1], [0], [0], [1], [0, 0, 1, 1], [], []>} : vector<8x32xf32>, vector<32x64xf32>, vector<8x64xf32> -> vector<8x64xf32>
    %c0_5 = arith.constant 0 : index
    %c0_6 = arith.constant 0 : index
    %4 = vector.load %arg3[%c0_5, %c0_6] : memref<1x64xf32, #tpu.memory_space<vmem>>, vector<1x64xf32>
    %5 = vector.broadcast %4 : vector<1x64xf32> to vector<8x64xf32>
    %6 = arith.addf %3, %5 : vector<8x64xf32>
    %7 = math.tanh %6 : vector<8x64xf32>
    %cst_7 = arith.constant dense<0.000000e+00> : vector<8x64xf32>
    %8 = tpu.matmul %7, %2, %cst_7 {dimension_numbers = #tpu.dot_dimension_numbers<[1], [0], [0], [1], [0, 0, 1, 1], [], []>} : vector<8x64xf32>, vector<64x64xf32>, vector<8x64xf32> -> vector<8x64xf32>
    %c0_8 = arith.constant 0 : index
    %c0_9 = arith.constant 0 : index
    %9 = vector.load %arg5[%c0_8, %c0_9] : memref<1x64xf32, #tpu.memory_space<vmem>>, vector<1x64xf32>
    %10 = vector.broadcast %9 : vector<1x64xf32> to vector<8x64xf32>
    %11 = arith.addf %8, %10 : vector<8x64xf32>
    %12 = vector.extract_strided_slice %11 {offsets = [0, 0], sizes = [8, 32], strides = [1, 1]} : vector<8x64xf32> to vector<8x32xf32>
    %13 = vector.extract_strided_slice %11 {offsets = [0, 32], sizes = [8, 32], strides = [1, 1]} : vector<8x64xf32> to vector<8x32xf32>
    %cst_10 = arith.constant 5.000000e-01 : f32
    %14 = vector.broadcast %cst_10 : f32 to vector<8x32xf32>
    %15 = arith.mulf %14, %13 : vector<8x32xf32>
    %16 = math.exp %15 : vector<8x32xf32>
    %c0_11 = arith.constant 0 : index
    %c0_12 = arith.constant 0 : index
    %17 = vector.load %arg6[%c0_11, %c0_12] : memref<8x32xf32, #tpu.memory_space<vmem>>, vector<8x32xf32>
    %18 = arith.mulf %17, %16 : vector<8x32xf32>
    %19 = arith.addf %18, %12 : vector<8x32xf32>
    %cst_13 = arith.constant 1.000000e+00 : f32
    %20 = vector.broadcast %cst_13 : f32 to vector<8x32xf32>
    %21 = arith.addf %20, %13 : vector<8x32xf32>
    %22 = arith.mulf %12, %12 : vector<8x32xf32>
    %23 = arith.subf %21, %22 : vector<8x32xf32>
    %24 = arith.mulf %16, %16 : vector<8x32xf32>
    %25 = arith.subf %23, %24 : vector<8x32xf32>
    %26 = tpu.concatenate %19, %25 in 1 : vector<8x32xf32>, vector<8x32xf32> -> vector<8x64xf32>
    %c0_14 = arith.constant 0 : index
    %c0_15 = arith.constant 0 : index
    %27 = vector.load %arg7[%c0_14, %c0_15] : memref<8x64xf32, #tpu.memory_space<vmem>>, vector<8x64xf32>
    tpu.vector_store %arg7[%c0_14, %c0_15], %26 {strides = array<i32>} : memref<8x64xf32, #tpu.memory_space<vmem>>, vector<8x64xf32>,
    return
  }
  func.func @transform_0(%arg0: i32) -> (i32, i32) {
    %c0_i32 = arith.constant 0 : i32
    %c0_i32_0 = arith.constant 0 : i32
    return %arg0, %c0_i32 : i32, i32
  }
  func.func @transform_1(%arg0: i32) -> (i32, i32) {
    %c0_i32 = arith.constant 0 : i32
    %c0_i32_0 = arith.constant 0 : i32
    %c0_i32_1 = arith.constant 0 : i32
    return %c0_i32, %c0_i32_0 : i32, i32
  }
  func.func @transform_2(%arg0: i32) -> (i32, i32) {
    %c0_i32 = arith.constant 0 : i32
    %c0_i32_0 = arith.constant 0 : i32
    %c0_i32_1 = arith.constant 0 : i32
    return %c0_i32, %c0_i32_0 : i32, i32
  }
  func.func @transform_3(%arg0: i32) -> (i32, i32) {
    %c0_i32 = arith.constant 0 : i32
    %c0_i32_0 = arith.constant 0 : i32
    %c0_i32_1 = arith.constant 0 : i32
    return %c0_i32, %c0_i32_0 : i32, i32
  }
  func.func @transform_4(%arg0: i32) -> (i32, i32) {
    %c0_i32 = arith.constant 0 : i32
    %c0_i32_0 = arith.constant 0 : i32
    %c0_i32_1 = arith.constant 0 : i32
    return %c0_i32, %c0_i32_0 : i32, i32
  }
  func.func @transform_5(%arg0: i32) -> (i32, i32) {
    %c0_i32 = arith.constant 0 : i32
    %c0_i32_0 = arith.constant 0 : i32
    return %arg0, %c0_i32 : i32, i32
  }
  func.func @transform_6(%arg0: i32) -> (i32, i32) {
    %c0_i32 = arith.constant 0 : i32
    %c0_i32_0 = arith.constant 0 : i32
    return %arg0, %c0_i32 : i32, i32
  }
}

</mosaic_0001>

<llo_original>
// kernel: tpu_custom_call.1
$region0: #{tpu_custom_call.1}
  #allocation0 [shape = 'u32[]', space=smem, size = 0x4, offset = 0x4, fixed_abs, tag = 'smem constant byte address 0x4 - core index']
  #allocation1 [shape = 'u32[144,128]{1,0:T(1,128)}', space=vmem, size = 0x12000, scoped, tag = 'internal scratch']
  %s0 = inlined_call_operand.hbm [shape: f32[8,32], index: 0, kind: input, shape index: {}]
  %s1 = inlined_call_operand.hbm [shape: f32[32,64], index: 1, kind: input, shape index: {}]
  %s2 = inlined_call_operand.vmem [shape: f32[1,64], index: 2, kind: input, shape index: {}]
  %s3 = inlined_call_operand.hbm [shape: f32[64,64], index: 3, kind: input, shape index: {}]
  %s4 = inlined_call_operand.vmem [shape: f32[1,64], index: 4, kind: input, shape index: {}]
  %s5 = inlined_call_operand.vmem [shape: f32[8,32], index: 5, kind: input, shape index: {}]
  %s6 = inlined_call_operand.hbm [shape: f32[8,64], index: 6, kind: output, shape index: {}]
  %s7 = sld [smem:[#allocation0]]
  $region46: #{tpu_custom_call.1} parent=0
    _
  %s9 = ssub.s32 1, %s7
  %s10 = scalar_select 0, %s9, %s7
  $region1: #{tpu_custom_call.1} parent=0
    #allocation2 [shape = 'u8[4096]{0}', space=vmem, size = 0x1000, scoped, tag = 'input window, operand 0, single buffered']
    #allocation3 [shape = 's32[1]{0}', space=sflag, size = 0x4, scoped, tag = 'scoped memory for tpu_custom_call.1']
    #allocation4 [shape = 's32[1]{0}', space=sflag, size = 0x4, scoped, tag = 'scoped memory for tpu_custom_call.1']
    #allocation5 [shape = 'u8[16384]{0}', space=vmem, size = 0x4000, scoped, tag = 'input window, operand 1, single buffered']
    #allocation6 [shape = 's32[1]{0}', space=sflag, size = 0x4, scoped, tag = 'scoped memory for tpu_custom_call.1']
    #allocation7 [shape = 'u8[32768]{0}', space=vmem, size = 0x8000, scoped, tag = 'input window, operand 3, single buffered']
    #allocation8 [shape = 'u8[4096]{0}', space=vmem, size = 0x1000, scoped, tag = 'output window, operand 0, single buffered']
    %11 = vsyncpa [#allocation3], 0
    %12 = vsyncpa [#allocation6], 0
    %13 = vsyncpa [#allocation4], 0
    // Predicated region
    $region2: #{tpu_custom_call.1} parent=1 // pred_check
      _
    $region3: #{tpu_custom_call.1} parent=1 // pred_check_branch
      %15 = sbr.rel (0) target = $region5
    $region4: #{tpu_custom_call.1} parent=1 // pred_region
      %s17 = ssub.s32 128, 128
      %18 = vsyncadd [#allocation3], %s17
      %s20 = sshll.u32 [#allocation2], 4
      %s21 = int_to_ptr.vmem [resolvable:$true] %s20
      %23 = dma.hbm_to_vmem [thread:$0]  %s0, 128, %s21, [#allocation3]
    $region5: #{tpu_custom_call.1} parent=1 // pred_fallthru
      _
    // Predicated region
    $region6: #{tpu_custom_call.1} parent=1 // pred_check
      _
    $region7: #{tpu_custom_call.1} parent=1 // pred_check_branch
      %25 = sbr.rel (0) target = $region9
    $region8: #{tpu_custom_call.1} parent=1 // pred_region
      %s27 = ssub.s32 512, 512
      %28 = vsyncadd [#allocation6], %s27
      %s29 = sshll.u32 [#allocation5], 4
      %s30 = int_to_ptr.vmem [resolvable:$true] %s29
      %35 = dma.hbm_to_vmem [thread:$0]  %s1, 512, %s30, [#allocation6], 128, 128, 8
    $region9: #{tpu_custom_call.1} parent=1 // pred_fallthru
      _
    // Predicated region
    $region10: #{tpu_custom_call.1} parent=1 // pred_check
      _
    $region11: #{tpu_custom_call.1} parent=1 // pred_check_branch
      %37 = sbr.rel (0) target = $region13
    $region12: #{tpu_custom_call.1} parent=1 // pred_region
      _
    $region13: #{tpu_custom_call.1} parent=1 // pred_fallthru
      _
    // Predicated region
    $region14: #{tpu_custom_call.1} parent=1 // pred_check
      _
    $region15: #{tpu_custom_call.1} parent=1 // pred_check_branch
      %39 = sbr.rel (0) target = $region17
    $region16: #{tpu_custom_call.1} parent=1 // pred_region
      %s41 = ssub.s32 1024, 1024
      %42 = vsyncadd [#allocation6], %s41
      %s43 = sshll.u32 [#allocation7], 4
      %s44 = int_to_ptr.vmem [resolvable:$true] %s43
      %49 = dma.hbm_to_vmem [thread:$0]  %s3, 1024, %s44, [#allocation6], 128, 128, 8
    $region17: #{tpu_custom_call.1} parent=1 // pred_fallthru
      _
    // Predicated region
    $region18: #{tpu_custom_call.1} parent=1 // pred_check
      _
    $region19: #{tpu_custom_call.1} parent=1 // pred_check_branch
      %51 = sbr.rel (0) target = $region21
    $region20: #{tpu_custom_call.1} parent=1 // pred_region
      _
    $region21: #{tpu_custom_call.1} parent=1 // pred_fallthru
      _
    // Predicated region
    $region22: #{tpu_custom_call.1} parent=1 // pred_check
      _
    $region23: #{tpu_custom_call.1} parent=1 // pred_check_branch
      %53 = sbr.rel (0) target = $region25
    $region24: #{tpu_custom_call.1} parent=1 // pred_region
      _
    $region25: #{tpu_custom_call.1} parent=1 // pred_fallthru
      _
    // Predicated region
    $region26: #{tpu_custom_call.1} parent=1 // pred_check
      _
    $region27: #{tpu_custom_call.1} parent=1 // pred_check_branch
      %55 = sbr.rel (0) target = $region29
    $region28: #{tpu_custom_call.1} parent=1 // pred_region
      %56 = dma.done [#allocation3], 128
    $region29: #{tpu_custom_call.1} parent=1 // pred_fallthru
      _
    // Predicated region
    $region30: #{tpu_custom_call.1} parent=1 // pred_check
      _
    $region31: #{tpu_custom_call.1} parent=1 // pred_check_branch
      %58 = sbr.rel (0) target = $region33
    $region32: #{tpu_custom_call.1} parent=1 // pred_region
      %59 = dma.done [#allocation6], 512
    $region33: #{tpu_custom_call.1} parent=1 // pred_fallthru
      _
    // Predicated region
    $region34: #{tpu_custom_call.1} parent=1 // pred_check
      _
    $region35: #{tpu_custom_call.1} parent=1 // pred_check_branch
      %61 = sbr.rel (0) target = $region37
    $region36: #{tpu_custom_call.1} parent=1 // pred_region
      %62 = dma.done [#allocation6], 1024
    $region37: #{tpu_custom_call.1} parent=1 // pred_fallthru
      _
    %v63 = vld [vmem:[#allocation2] sm:$0xff]
    %v64 = vld [vmem:[#allocation5] sm:$0xff]
    %v65 = vld [vmem:[#allocation5 + $0x8] sm:$0xff]
    %v66 = vld [vmem:[#allocation5 + $0x10] sm:$0xff]
    %v67 = vld [vmem:[#allocation5 + $0x18] sm:$0xff]
    %v68 = vld [vmem:[#allocation7] sm:$0xff]
    %v69 = vld [vmem:[#allocation7 + $0x8] sm:$0xff]
    %v70 = vld [vmem:[#allocation7 + $0x10] sm:$0xff]
    %v71 = vld [vmem:[#allocation7 + $0x18] sm:$0xff]
    %v72 = vld [vmem:[#allocation7 + $0x20] sm:$0xff]
    %v73 = vld [vmem:[#allocation7 + $0x28] sm:$0xff]
    %v74 = vld [vmem:[#allocation7 + $0x30] sm:$0xff]
    %v75 = vld [vmem:[#allocation7 + $0x38] sm:$0xff]
    %v76 = vld [vmem:[%s2] sm:$0x1]
    %v78 = vlaneseq
    %v79 = vshrl.u32 %v78, 7
    %v80 = vsub.s32 0, %v79
    %v81 = vrot.slane %v76, %v80
    %vm83 = vcmask 261120
    %v85 = vsel %vm83, %v63, 0
    %87 = vmatprep.subr.mxu0 0.0
    %88 = vmatpush1.msra.mxu0 %v64
    %89 = vmatprep.subr.mxu0 0.0
    %90 = vmatpush1.msra.mxu0 %v65
    %91 = vmatprep.subr.mxu0 0.0
    %92 = vmatpush1.msra.mxu0 %v66
    %93 = vmatprep.subr.mxu0 0.0
    %94 = vmatpush1.msra.mxu0 %v67
    %95 = vmatprep.subr.mxu0 0.0
    %96 = vmatpush1.msra.mxu0 0.0
    %97 = vmatprep.subr.mxu0 0.0
    %98 = vmatpush1.msra.mxu0 0.0
    %99 = vmatprep.subr.mxu0 0.0
    %100 = vmatpush1.msra.mxu0 0.0
    %101 = vmatprep.subr.mxu0 0.0
    %102 = vmatpush1.msra.mxu0 0.0
    %103 = vmatprep.subr.mxu0 0.0
    %104 = vmatpush1.msra.mxu0 0.0
    %105 = vmatprep.subr.mxu0 0.0
    %106 = vmatpush1.msra.mxu0 0.0
    %107 = vmatprep.subr.mxu0 0.0
    %108 = vmatpush1.msra.mxu0 0.0
    %109 = vmatprep.subr.mxu0 0.0
    %110 = vmatpush1.msra.mxu0 0.0
    %111 = vmatprep.subr.mxu0 0.0
    %112 = vmatpush1.msra.mxu0 0.0
    %113 = vmatprep.subr.mxu0 0.0
    %114 = vmatpush1.msra.mxu0 0.0
    %115 = vmatprep.subr.mxu0 0.0
    %116 = vmatpush1.msra.mxu0 0.0
    %117 = vmatprep.subr.mxu0 0.0
    %118 = vmatpush1.msra.mxu0 0.0
    %119 = vmatprep.subr.mxu0 0.0
    %120 = vmatpush1.msra.mxu0 0.0
    %121 = vmatprep.subr.mxu0 0.0
    %122 = vmatpush1.msra.mxu0 0.0
    %123 = vmatprep.subr.mxu0 0.0
    %124 = vmatpush1.msra.mxu0 0.0
    %125 = vmatprep.subr.mxu0 0.0
    %126 = vmatpush1.msra.mxu0 0.0
    %127 = vmatprep.subr.mxu0 0.0
    %128 = vmatpush1.msra.mxu0 0.0
    %129 = vmatprep.subr.mxu0 0.0
    %130 = vmatpush1.msra.mxu0 0.0
    %131 = vmatprep.subr.mxu0 0.0
    %132 = vmatpush1.msra.mxu0 0.0
    %133 = vmatprep.subr.mxu0 0.0
    %134 = vmatpush1.msra.mxu0 0.0
    %135 = vmatprep.subr.mxu0 0.0
    %136 = vmatpush1.msra.mxu0 0.0
    %137 = vmatprep.subr.mxu0 0.0
    %138 = vmatpush1.msra.mxu0 0.0
    %139 = vmatprep.subr.mxu0 0.0
    %140 = vmatpush1.msra.mxu0 0.0
    %141 = vmatprep.subr.mxu0 0.0
    %142 = vmatpush1.msra.mxu0 0.0
    %143 = vmatprep.subr.mxu0 0.0
    %144 = vmatpush1.msra.mxu0 0.0
    %145 = vmatprep.subr.mxu0 0.0
    %146 = vmatpush1.msra.mxu0 0.0
    %147 = vmatprep.subr.mxu0 0.0
    %148 = vmatpush1.msra.mxu0 0.0
    %149 = vmatprep.subr.mxu0 0.0
    %150 = vmatpush1.msra.mxu0 0.0
    %151 = vmatprep.mubr.f32.mxu0 0.0
    %152 = vmatmul.mubr.f32.gmra.mrb[0].mxu0 %v85
    %v153 = vpop.f32.mrb[0].mxu0
    %v154 = vadd.f32 %v81, %v153
    %v155 = vpop.f32.mrb[0].mxu0
    %156 = vdwg.mxu0
    %v157 = vtanh.pop %v154
    %v158 = vld [vmem:[%s4] sm:$0x1]
    %v160 = vlaneseq
    %v161 = vshrl.u32 %v160, 7
    %v162 = vsub.s32 0, %v161
    %v163 = vrot.slane %v158, %v162
    %vm165 = vcmask 523264
    %v167 = vsel %vm165, %v157, 0
    %169 = vmatprep.subr.mxu0 0.0
    %170 = vmatpush1.msra.mxu0 %v68
    %171 = vmatprep.subr.mxu0 0.0
    %172 = vmatpush1.msra.mxu0 %v69
    %173 = vmatprep.subr.mxu0 0.0
    %174 = vmatpush1.msra.mxu0 %v70
    %175 = vmatprep.subr.mxu0 0.0
    %176 = vmatpush1.msra.mxu0 %v71
    %177 = vmatprep.subr.mxu0 0.0
    %178 = vmatpush1.msra.mxu0 %v72
    %179 = vmatprep.subr.mxu0 0.0
    %180 = vmatpush1.msra.mxu0 %v73
    %181 = vmatprep.subr.mxu0 0.0
    %182 = vmatpush1.msra.mxu0 %v74
    %183 = vmatprep.subr.mxu0 0.0
    %184 = vmatpush1.msra.mxu0 %v75
    %185 = vmatprep.subr.mxu0 0.0
    %186 = vmatpush1.msra.mxu0 0.0
    %187 = vmatprep.subr.mxu0 0.0
    %188 = vmatpush1.msra.mxu0 0.0
    %189 = vmatprep.subr.mxu0 0.0
    %190 = vmatpush1.msra.mxu0 0.0
    %191 = vmatprep.subr.mxu0 0.0
    %192 = vmatpush1.msra.mxu0 0.0
    %193 = vmatprep.subr.mxu0 0.0
    %194 = vmatpush1.msra.mxu0 0.0
    %195 = vmatprep.subr.mxu0 0.0
    %196 = vmatpush1.msra.mxu0 0.0
    %197 = vmatprep.subr.mxu0 0.0
    %198 = vmatpush1.msra.mxu0 0.0
    %199 = vmatprep.subr.mxu0 0.0
    %200 = vmatpush1.msra.mxu0 0.0
    %201 = vmatprep.subr.mxu0 0.0
    %202 = vmatpush1.msra.mxu0 0.0
    %203 = vmatprep.subr.mxu0 0.0
    %204 = vmatpush1.msra.mxu0 0.0
    %205 = vmatprep.subr.mxu0 0.0
    %206 = vmatpush1.msra.mxu0 0.0
    %207 = vmatprep.subr.mxu0 0.0
    %208 = vmatpush1.msra.mxu0 0.0
    %209 = vmatprep.subr.mxu0 0.0
    %210 = vmatpush1.msra.mxu0 0.0
    %211 = vmatprep.subr.mxu0 0.0
    %212 = vmatpush1.msra.mxu0 0.0
    %213 = vmatprep.subr.mxu0 0.0
    %214 = vmatpush1.msra.mxu0 0.0
    %215 = vmatprep.subr.mxu0 0.0
    %216 = vmatpush1.msra.mxu0 0.0
    %217 = vmatprep.subr.mxu0 0.0
    %218 = vmatpush1.msra.mxu0 0.0
    %219 = vmatprep.subr.mxu0 0.0
    %220 = vmatpush1.msra.mxu0 0.0
    %221 = vmatprep.subr.mxu0 0.0
    %222 = vmatpush1.msra.mxu0 0.0
    %223 = vmatprep.subr.mxu0 0.0
    %224 = vmatpush1.msra.mxu0 0.0
    %225 = vmatprep.subr.mxu0 0.0
    %226 = vmatpush1.msra.mxu0 0.0
    %227 = vmatprep.subr.mxu0 0.0
    %228 = vmatpush1.msra.mxu0 0.0
    %229 = vmatprep.subr.mxu0 0.0
    %230 = vmatpush1.msra.mxu0 0.0
    %231 = vmatprep.subr.mxu0 0.0
    %232 = vmatpush1.msra.mxu0 0.0
    %233 = vmatprep.mubr.f32.mxu0 0.0
    %234 = vmatmul.mubr.f32.gmra.mrb[0].mxu0 %v167
    %v235 = vpop.f32.mrb[0].mxu0
    %v236 = vadd.f32 %v163, %v235
    %v237 = vpop.f32.mrb[0].mxu0
    %238 = vdwg.mxu0
    %v239 = vmul.f32 %v236, 0.5
    %v240 = vmul.f32 %v239, 1.442695
    %v241 = vpow.pop %v240
    %v242 = vld [vmem:[%s5] sm:$0xff]
    %244 = vrot.lane.b32.xlu0 %v241, 96
    %v245 = vpop.permute.xlu0 %244
    %v247 = vmul.f32 %v242, %v245
    %v248 = vadd.f32 %v247, %v236
    %v249 = vadd.f32 %v236, 1.0
    %v250 = vmul.f32 %v236, %v236
    %252 = vrot.lane.b32.xlu0 %v250, 32
    %v253 = vpop.permute.xlu0 %252
    %v255 = vsub.f32 %v249, %v253
    %v256 = vmul.f32 %v241, %v241
    %v257 = vsub.f32 %v255, %v256
    %v258 = vsel %vm83, %v248, %v257
    %259 = vst.msk [vmem:[#allocation8] sm:$0xff] %vm165, %v258
    // Predicated region
    $region38: #{tpu_custom_call.1} parent=1 // pred_check
      _
    $region39: #{tpu_custom_call.1} parent=1 // pred_check_branch
      %261 = sbr.rel (0) target = $region41
    $region40: #{tpu_custom_call.1} parent=1 // pred_region
      %s263 = ssub.s32 128, 128
      %264 = vsyncadd [#allocation4], %s263
      %s266 = sshll.u32 [#allocation8], 4
      %s267 = int_to_ptr.vmem [resolvable:$true] %s266
      %269 = dma.vmem_to_hbm [thread:$0]  %s267, 128, %s6, [#allocation4]
    $region41: #{tpu_custom_call.1} parent=1 // pred_fallthru
      _
    // Predicated region
    $region42: #{tpu_custom_call.1} parent=1 // pred_check
      _
    $region43: #{tpu_custom_call.1} parent=1 // pred_check_branch
      %271 = sbr.rel (0) target = $region45
    $region44: #{tpu_custom_call.1} parent=1 // pred_region
      %272 = dma.done [#allocation4], 128
    $region45: #{tpu_custom_call.1} parent=1 // pred_fallthru
      _
    %273 = vsyncpa [#allocation3], 1
    %274 = vsyncpa [#allocation6], 1
    %275 = vsyncpa [#allocation4], 1

// kernel: tpu_custom_call.1
$region0: #{tpu_custom_call.1}
  #allocation0 [shape = 'u32[]', space=smem, size = 0x4, offset = 0x4, fixed_abs, tag = 'smem constant byte address 0x4 - core index']
  #allocation1 [shape = 'u32[144,128]{1,0:T(1,128)}', space=vmem, size = 0x12000, scoped, tag = 'internal scratch']
  %s0 = inlined_call_operand.hbm [shape: f32[8,32], index: 0, kind: input, shape index: {}]
  %s1 = inlined_call_operand.hbm [shape: f32[32,64], index: 1, kind: input, shape index: {}]
  %s2 = inlined_call_operand.vmem [shape: f32[1,64], index: 2, kind: input, shape index: {}]
  %s3 = inlined_call_operand.hbm [shape: f32[64,64], index: 3, kind: input, shape index: {}]
  %s4 = inlined_call_operand.vmem [shape: f32[1,64], index: 4, kind: input, shape index: {}]
  %s5 = inlined_call_operand.vmem [shape: f32[8,32], index: 5, kind: input, shape index: {}]
  %s6 = inlined_call_operand.hbm [shape: f32[8,64], index: 6, kind: output, shape index: {}]
  %s7 = sld [smem:[#allocation0]]
  $region46: #{tpu_custom_call.1} parent=0
    _
  %s9 = ssub.s32 1, %s7
  %s10 = scalar_select 0, %s9, %s7
  $region1: #{tpu_custom_call.1} parent=0
    #allocation2 [shape = 'u8[4096]{0}', space=vmem, size = 0x1000, scoped, tag = 'input window, operand 0, single buffered']
    #allocation3 [shape = 's32[1]{0}', space=sflag, size = 0x4, scoped, tag = 'scoped memory for tpu_custom_call.1']
    #allocation4 [shape = 's32[1]{0}', space=sflag, size = 0x4, scoped, tag = 'scoped memory for tpu_custom_call.1']
    #allocation5 [shape = 'u8[16384]{0}', space=vmem, size = 0x4000, scoped, tag = 'input window, operand 1, single buffered']
    #allocation6 [shape = 's32[1]{0}', space=sflag, size = 0x4, scoped, tag = 'scoped memory for tpu_custom_call.1']
    #allocation7 [shape = 'u8[32768]{0}', space=vmem, size = 0x8000, scoped, tag = 'input window, operand 3, single buffered']
    #allocation8 [shape = 'u8[4096]{0}', space=vmem, size = 0x1000, scoped, tag = 'output window, operand 0, single buffered']
    %11 = vsyncpa [#allocation3], 0
    %12 = vsyncpa [#allocation6], 0
    %13 = vsyncpa [#allocation4], 0
    // Predicated region
    $region2: #{tpu_custom_call.1} parent=1 // pred_check
      _
    $region3: #{tpu_custom_call.1} parent=1 // pred_check_branch
      %15 = sbr.rel (0) target = $region5
    $region4: #{tpu_custom_call.1} parent=1 // pred_region
      %s17 = ssub.s32 128, 128
      %18 = vsyncadd [#allocation3], %s17
      %s20 = sshll.u32 [#allocation2], 4
      %s21 = int_to_ptr.vmem [resolvable:$true] %s20
      %23 = dma.hbm_to_vmem [thread:$0]  %s0, 128, %s21, [#allocation3]
    $region5: #{tpu_custom_call.1} parent=1 // pred_fallthru
      _
    // Predicated region
    $region6: #{tpu_custom_call.1} parent=1 // pred_check
      _
    $region7: #{tpu_custom_call.1} parent=1 // pred_check_branch
      %25 = sbr.rel (0) target = $region9
    $region8: #{tpu_custom_call.1} parent=1 // pred_region
      %s27 = ssub.s32 512, 512
      %28 = vsyncadd [#allocation6], %s27
      %s29 = sshll.u32 [#allocation5], 4
      %s30 = int_to_ptr.vmem [resolvable:$true] %s29
      %35 = dma.hbm_to_vmem [thread:$0]  %s1, 512, %s30, [#allocation6], 128, 128, 8
    $region9: #{tpu_custom_call.1} parent=1 // pred_fallthru
      _
    // Predicated region
    $region10: #{tpu_custom_call.1} parent=1 // pred_check
      _
    $region11: #{tpu_custom_call.1} parent=1 // pred_check_branch
      %37 = sbr.rel (0) target = $region13
    $region12: #{tpu_custom_call.1} parent=1 // pred_region
      _
    $region13: #{tpu_custom_call.1} parent=1 // pred_fallthru
      _
    // Predicated region
    $region14: #{tpu_custom_call.1} parent=1 // pred_check
      _
    $region15: #{tpu_custom_call.1} parent=1 // pred_check_branch
      %39 = sbr.rel (0) target = $region17
    $region16: #{tpu_custom_call.1} parent=1 // pred_region
      %s41 = ssub.s32 1024, 1024
      %42 = vsyncadd [#allocation6], %s41
      %s43 = sshll.u32 [#allocation7], 4
      %s44 = int_to_ptr.vmem [resolvable:$true] %s43
      %49 = dma.hbm_to_vmem [thread:$0]  %s3, 1024, %s44, [#allocation6], 128, 128, 8
    $region17: #{tpu_custom_call.1} parent=1 // pred_fallthru
      _
    // Predicated region
    $region18: #{tpu_custom_call.1} parent=1 // pred_check
      _
    $region19: #{tpu_custom_call.1} parent=1 // pred_check_branch
      %51 = sbr.rel (0) target = $region21
    $region20: #{tpu_custom_call.1} parent=1 // pred_region
      _
    $region21: #{tpu_custom_call.1} parent=1 // pred_fallthru
      _
    // Predicated region
    $region22: #{tpu_custom_call.1} parent=1 // pred_check
      _
    $region23: #{tpu_custom_call.1} parent=1 // pred_check_branch
      %53 = sbr.rel (0) target = $region25
    $region24: #{tpu_custom_call.1} parent=1 // pred_region
      _
    $region25: #{tpu_custom_call.1} parent=1 // pred_fallthru
      _
    // Predicated region
    $region26: #{tpu_custom_call.1} parent=1 // pred_check
      _
    $region27: #{tpu_custom_call.1} parent=1 // pred_check_branch
      %55 = sbr.rel (0) target = $region29
    $region28: #{tpu_custom_call.1} parent=1 // pred_region
      %56 = dma.done [#allocation3], 128
    $region29: #{tpu_custom_call.1} parent=1 // pred_fallthru
      _
    // Predicated region
    $region30: #{tpu_custom_call.1} parent=1 // pred_check
      _
    $region31: #{tpu_custom_call.1} parent=1 // pred_check_branch
      %58 = sbr.rel (0) target = $region33
    $region32: #{tpu_custom_call.1} parent=1 // pred_region
      %59 = dma.done [#allocation6], 512
    $region33: #{tpu_custom_call.1} parent=1 // pred_fallthru
      _
    // Predicated region
    $region34: #{tpu_custom_call.1} parent=1 // pred_check
      _
    $region35: #{tpu_custom_call.1} parent=1 // pred_check_branch
      %61 = sbr.rel (0) target = $region37
    $region36: #{tpu_custom_call.1} parent=1 // pred_region
      %62 = dma.done [#allocation6], 1024
    $region37: #{tpu_custom_call.1} parent=1 // pred_fallthru
      _
    %v63 = vld [vmem:[#allocation2] sm:$0xff]
    %v64 = vld [vmem:[#allocation5] sm:$0xff]
    %v65 = vld [vmem:[#allocation5 + $0x8] sm:$0xff]
    %v66 = vld [vmem:[#allocation5 + $0x10] sm:$0xff]
    %v67 = vld [vmem:[#allocation5 + $0x18] sm:$0xff]
    %v68 = vld [vmem:[#allocation7] sm:$0xff]
    %v69 = vld [vmem:[#allocation7 + $0x8] sm:$0xff]
    %v70 = vld [vmem:[#allocation7 + $0x10] sm:$0xff]
    %v71 = vld [vmem:[#allocation7 + $0x18] sm:$0xff]
    %v72 = vld [vmem:[#allocation7 + $0x20] sm:$0xff]
    %v73 = vld [vmem:[#allocation7 + $0x28] sm:$0xff]
    %v74 = vld [vmem:[#allocation7 + $0x30] sm:$0xff]
    %v75 = vld [vmem:[#allocation7 + $0x38] sm:$0xff]
    %v76 = vld [vmem:[%s2] sm:$0x1]
    %v78 = vlaneseq
    %v79 = vshrl.u32 %v78, 7
    %v80 = vsub.s32 0, %v79
    %v81 = vrot.slane %v76, %v80
    %vm83 = vcmask 261120
    %v85 = vsel %vm83, %v63, 0
    %87 = vmatprep.subr.mxu0 0.0
    %88 = vmatpush1.msra.mxu0 %v64
    %89 = vmatprep.subr.mxu0 0.0
    %90 = vmatpush1.msra.mxu0 %v65
    %91 = vmatprep.subr.mxu0 0.0
    %92 = vmatpush1.msra.mxu0 %v66
    %93 = vmatprep.subr.mxu0 0.0
    %94 = vmatpush1.msra.mxu0 %v67
    %95 = vmatprep.subr.mxu0 0.0
    %96 = vmatpush1.msra.mxu0 0.0
    %97 = vmatprep.subr.mxu0 0.0
    %98 = vmatpush1.msra.mxu0 0.0
    %99 = vmatprep.subr.mxu0 0.0
    %100 = vmatpush1.msra.mxu0 0.0
    %101 = vmatprep.subr.mxu0 0.0
    %102 = vmatpush1.msra.mxu0 0.0
    %103 = vmatprep.subr.mxu0 0.0
    %104 = vmatpush1.msra.mxu0 0.0
    %105 = vmatprep.subr.mxu0 0.0
    %106 = vmatpush1.msra.mxu0 0.0
    %107 = vmatprep.subr.mxu0 0.0
    %108 = vmatpush1.msra.mxu0 0.0
    %109 = vmatprep.subr.mxu0 0.0
    %110 = vmatpush1.msra.mxu0 0.0
    %111 = vmatprep.subr.mxu0 0.0
    %112 = vmatpush1.msra.mxu0 0.0
    %113 = vmatprep.subr.mxu0 0.0
    %114 = vmatpush1.msra.mxu0 0.0
    %115 = vmatprep.subr.mxu0 0.0
    %116 = vmatpush1.msra.mxu0 0.0
    %117 = vmatprep.subr.mxu0 0.0
    %118 = vmatpush1.msra.mxu0 0.0
    %119 = vmatprep.subr.mxu0 0.0
    %120 = vmatpush1.msra.mxu0 0.0
    %121 = vmatprep.subr.mxu0 0.0
    %122 = vmatpush1.msra.mxu0 0.0
    %123 = vmatprep.subr.mxu0 0.0
    %124 = vmatpush1.msra.mxu0 0.0
    %125 = vmatprep.subr.mxu0 0.0
    %126 = vmatpush1.msra.mxu0 0.0
    %127 = vmatprep.subr.mxu0 0.0
    %128 = vmatpush1.msra.mxu0 0.0
    %129 = vmatprep.subr.mxu0 0.0
    %130 = vmatpush1.msra.mxu0 0.0
    %131 = vmatprep.subr.mxu0 0.0
    %132 = vmatpush1.msra.mxu0 0.0
    %133 = vmatprep.subr.mxu0 0.0
    %134 = vmatpush1.msra.mxu0 0.0
    %135 = vmatprep.subr.mxu0 0.0
    %136 = vmatpush1.msra.mxu0 0.0
    %137 = vmatprep.subr.mxu0 0.0
    %138 = vmatpush1.msra.mxu0 0.0
    %139 = vmatprep.subr.mxu0 0.0
    %140 = vmatpush1.msra.mxu0 0.0
    %141 = vmatprep.subr.mxu0 0.0
    %142 = vmatpush1.msra.mxu0 0.0
    %143 = vmatprep.subr.mxu0 0.0
    %144 = vmatpush1.msra.mxu0 0.0
    %145 = vmatprep.subr.mxu0 0.0
    %146 = vmatpush1.msra.mxu0 0.0
    %147 = vmatprep.subr.mxu0 0.0
    %148 = vmatpush1.msra.mxu0 0.0
    %149 = vmatprep.subr.mxu0 0.0
    %150 = vmatpush1.msra.mxu0 0.0
    %151 = vmatprep.mubr.f32.mxu0 0.0
    %152 = vmatmul.mubr.f32.gmra.mrb[0].mxu0 %v85
    %v153 = vpop.f32.mrb[0].mxu0
    %v154 = vadd.f32 %v81, %v153
    %v155 = vpop.f32.mrb[0].mxu0
    %156 = vdwg.mxu0
    %v157 = vtanh.pop %v154
    %v158 = vld [vmem:[%s4] sm:$0x1]
    %v160 = vlaneseq
    %v161 = vshrl.u32 %v160, 7
    %v162 = vsub.s32 0, %v161
    %v163 = vrot.slane %v158, %v162
    %vm165 = vcmask 523264
    %v167 = vsel %vm165, %v157, 0
    %169 = vmatprep.subr.mxu0 0.0
    %170 = vmatpush1.msra.mxu0 %v68
    %171 = vmatprep.subr.mxu0 0.0
    %172 = vmatpush1.msra.mxu0 %v69
    %173 = vmatprep.subr.mxu0 0.0
    %174 = vmatpush1.msra.mxu0 %v70
    %175 = vmatprep.subr.mxu0 0.0
    %176 = vmatpush1.msra.mxu0 %v71
    %177 = vmatprep.subr.mxu0 0.0
    %178 = vmatpush1.msra.mxu0 %v72
    %179 = vmatprep.subr.mxu0 0.0
    %180 = vmatpush1.msra.mxu0 %v73
    %181 = vmatprep.subr.mxu0 0.0
    %182 = vmatpush1.msra.mxu0 %v74
    %183 = vmatprep.subr.mxu0 0.0
    %184 = vmatpush1.msra.mxu0 %v75
    %185 = vmatprep.subr.mxu0 0.0
    %186 = vmatpush1.msra.mxu0 0.0
    %187 = vmatprep.subr.mxu0 0.0
    %188 = vmatpush1.msra.mxu0 0.0
    %189 = vmatprep.subr.mxu0 0.0
    %190 = vmatpush1.msra.mxu0 0.0
    %191 = vmatprep.subr.mxu0 0.0
    %192 = vmatpush1.msra.mxu0 0.0
    %193 = vmatprep.subr.mxu0 0.0
    %194 = vmatpush1.msra.mxu0 0.0
    %195 = vmatprep.subr.mxu0 0.0
    %196 = vmatpush1.msra.mxu0 0.0
    %197 = vmatprep.subr.mxu0 0.0
    %198 = vmatpush1.msra.mxu0 0.0
    %199 = vmatprep.subr.mxu0 0.0
    %200 = vmatpush1.msra.mxu0 0.0
    %201 = vmatprep.subr.mxu0 0.0
    %202 = vmatpush1.msra.mxu0 0.0
    %203 = vmatprep.subr.mxu0 0.0
    %204 = vmatpush1.msra.mxu0 0.0
    %205 = vmatprep.subr.mxu0 0.0
    %206 = vmatpush1.msra.mxu0 0.0
    %207 = vmatprep.subr.mxu0 0.0
    %208 = vmatpush1.msra.mxu0 0.0
    %209 = vmatprep.subr.mxu0 0.0
    %210 = vmatpush1.msra.mxu0 0.0
    %211 = vmatprep.subr.mxu0 0.0
    %212 = vmatpush1.msra.mxu0 0.0
    %213 = vmatprep.subr.mxu0 0.0
    %214 = vmatpush1.msra.mxu0 0.0
    %215 = vmatprep.subr.mxu0 0.0
    %216 = vmatpush1.msra.mxu0 0.0
    %217 = vmatprep.subr.mxu0 0.0
    %218 = vmatpush1.msra.mxu0 0.0
    %219 = vmatprep.subr.mxu0 0.0
    %220 = vmatpush1.msra.mxu0 0.0
    %221 = vmatprep.subr.mxu0 0.0
    %222 = vmatpush1.msra.mxu0 0.0
    %223 = vmatprep.subr.mxu0 0.0
    %224 = vmatpush1.msra.mxu0 0.0
    %225 = vmatprep.subr.mxu0 0.0
    %226 = vmatpush1.msra.mxu0 0.0
    %227 = vmatprep.subr.mxu0 0.0
    %228 = vmatpush1.msra.mxu0 0.0
    %229 = vmatprep.subr.mxu0 0.0
    %230 = vmatpush1.msra.mxu0 0.0
    %231 = vmatprep.subr.mxu0 0.0
    %232 = vmatpush1.msra.mxu0 0.0
    %233 = vmatprep.mubr.f32.mxu0 0.0
    %234 = vmatmul.mubr.f32.gmra.mrb[0].mxu0 %v167
    %v235 = vpop.f32.mrb[0].mxu0
    %v236 = vadd.f32 %v163, %v235
    %v237 = vpop.f32.mrb[0].mxu0
    %238 = vdwg.mxu0
    %v239 = vmul.f32 %v236, 0.5
    %v240 = vmul.f32 %v239, 1.442695
    %v241 = vpow.pop %v240
    %v242 = vld [vmem:[%s5] sm:$0xff]
    %244 = vrot.lane.b32.xlu0 %v241, 96
    %v245 = vpop.permute.xlu0 %244
    %v247 = vmul.f32 %v242, %v245
    %v248 = vadd.f32 %v247, %v236
    %v249 = vadd.f32 %v236, 1.0
    %v250 = vmul.f32 %v236, %v236
    %252 = vrot.lane.b32.xlu0 %v250, 32
    %v253 = vpop.permute.xlu0 %252
    %v255 = vsub.f32 %v249, %v253
    %v256 = vmul.f32 %v241, %v241
    %v257 = vsub.f32 %v255, %v256
    %v258 = vsel %vm83, %v248, %v257
    %259 = vst.msk [vmem:[#allocation8] sm:$0xff] %vm165, %v258
    // Predicated region
    $region38: #{tpu_custom_call.1} parent=1 // pred_check
      _
    $region39: #{tpu_custom_call.1} parent=1 // pred_check_branch
      %261 = sbr.rel (0) target = $region41
    $region40: #{tpu_custom_call.1} parent=1 // pred_region
      %s263 = ssub.s32 128, 128
      %264 = vsyncadd [#allocation4], %s263
      %s266 = sshll.u32 [#allocation8], 4
      %s267 = int_to_ptr.vmem [resolvable:$true] %s266
      %269 = dma.vmem_to_hbm [thread:$0]  %s267, 128, %s6, [#allocation4]
    $region41: #{tpu_custom_call.1} parent=1 // pred_fallthru
      _
    // Predicated region
    $region42: #{tpu_custom_call.1} parent=1 // pred_check
      _
    $region43: #{tpu_custom_call.1} parent=1 // pred_check_branch
      %271 = sbr.rel (0) target = $region45
    $region44: #{tpu_custom_call.1} parent=1 // pred_region
      %272 = dma.done [#allocation4], 128
    $region45: #{tpu_custom_call.1} parent=1 // pred_fallthru
      _
    %273 = vsyncpa [#allocation3], 1
    %274 = vsyncpa [#allocation6], 1
    %275 = vsyncpa [#allocation4], 1

</llo_original>
